<compile_context>
chip_gen: v6e
topology: v6e:2x2x1
jax: 0.10.0
libtpu: 0.0.40
codegen_flags: <defaults>
</compile_context>

<pallas_src>
import jax
import jax.numpy as jnp
from jax.experimental import pallas as pl
from jax.experimental.pallas import tpu as pltpu


def _addpads_kernel(x_ref, o_ref):
    tb, s = x_ref.shape
    _, l = o_ref.shape

    # Input prefix: lane-dense stores; only the final boundary vreg column is
    # masked when s is not a multiple of 128.
    o_ref[:, :s] = x_ref[...]

    if s == l:
        return

    # Next 128-lane boundary past the input (clamped to the output width).
    s_up = min(((s + 127) // 128) * 128, l)

    # Boundary zeros: at most one masked vreg column per 8 rows.
    if s_up > s:
        o_ref[:, s:s_up] = jnp.zeros((tb, s_up - s), dtype=o_ref.dtype)

    # Lane-aligned zero tail: unmasked, lane-dense stores.
    if s_up < l:
        o_ref[:, s_up:] = jnp.zeros((tb, l - s_up), dtype=o_ref.dtype)


def _sublane_quantum(dtype) -> int:
    # Sub-32-bit dtypes pack along sublanes: native tiles are (8,128) for
    # 32-bit, (16,128) for 16-bit, (32,128) for 8-bit.
    itemsize = jnp.dtype(dtype).itemsize
    return max(8, 32 // itemsize)


def add_pads(x: jax.Array, max_seq_len: int = 512, *,
             vmem_budget_bytes: int = 16 << 20,
             max_batch_tile: int | None = None) -> jax.Array:
    """Zero-pad x (B, S) along the last dim to (B, max_seq_len)."""
    B, S = x.shape
    if S > max_seq_len:
        raise ValueError("sequence length exceeds max_seq_len")
    if S == max_seq_len:
        return x

    # Lane-sparse output (L < 128): every store would be a masked vst.msk and
    # fixed pallas_call overhead dominates; let XLA fuse the pad instead.
    if max_seq_len < 128:
        return jnp.pad(x, ((0, 0), (0, max_seq_len - S)),
                       mode="constant", constant_values=0)

    q = _sublane_quantum(x.dtype)
    itemsize = jnp.dtype(x.dtype).itemsize

    if B <= q:
        # Full-extent batch block (full array dims always satisfy the (8,128)
        # divisibility rule).
        tb = B
    else:
        # Budget-based tile: double-buffered input + output tiles must fit the
        # VMEM budget -> 2 * (S + L) * itemsize bytes per row.
        bytes_per_row = 2 * (S + max_seq_len) * itemsize
        tb = max(q, (vmem_budget_bytes // bytes_per_row) // q * q)
        if max_batch_tile is not None:
            tb = max(q, min(tb, (max_batch_tile // q) * q))
        # Keep at least 2 grid steps so dimension_semantics="parallel" can
        # shard the batch across both v7x TensorCores.
        half = ((((B + 1) // 2) + q - 1) // q) * q
        tb = min(tb, half)

    grid = (pl.cdiv(B, tb),)

    cost = pl.CostEstimate(
        flops=0,
        transcendentals=0,
        bytes_accessed=B * S * itemsize + B * max_seq_len * itemsize,
    )

    # Actual footprint is <= vmem_budget_bytes by construction; leave headroom
    # but stay well under v7x's 64 MiB physical VMEM.
    vmem_limit_bytes = min(max(32 << 20, vmem_budget_bytes), 48 << 20)

    return pl.pallas_call(
        _addpads_kernel,
        out_shape=jax.ShapeDtypeStruct((B, max_seq_len), x.dtype),
        grid=grid,
        in_specs=[pl.BlockSpec((tb, S), lambda i: (i, 0))],
        out_specs=pl.BlockSpec((tb, max_seq_len), lambda i: (i, 0)),
        compiler_params=pltpu.CompilerParams(
            dimension_semantics=("parallel",),
            vmem_limit_bytes=vmem_limit_bytes,
        ),
        cost_estimate=cost,
    )(x)


if __name__ == "__main__":
    # Case 1: module-scale token ids with L < 128 -> fused jnp.pad fallback.
    B, S, L = 2, 8, 32
    x = jax.random.randint(jax.random.PRNGKey(0), (B, S), minval=1, maxval=100,
                           dtype=jnp.int32)
    out = jax.block_until_ready(add_pads(x, max_seq_len=L))
    ref = jnp.pad(x, ((0, 0), (0, L - S)), constant_values=0)
    assert out.shape == (B, L) and out.dtype == x.dtype
    assert bool(jnp.all(out == ref))

    # Case 2: module default max_seq_len=512, unaligned S -> Pallas kernel,
    # masked boundary-column path.
    B2, S2, L2 = 2, 8, 512
    x2 = jax.random.randint(jax.random.PRNGKey(0), (B2, S2), minval=1,
                            maxval=100, dtype=jnp.int32)
    out2 = jax.block_until_ready(add_pads(x2, max_seq_len=L2))
    ref2 = jnp.pad(x2, ((0, 0), (0, L2 - S2)), constant_values=0)
    assert bool(jnp.all(out2 == ref2))

    # Case 3: lane-aligned split point, batch tiled (grid with 2 even steps).
    B3, S3, L3 = 16, 128, 256
    x3 = jax.random.randint(jax.random.PRNGKey(1), (B3, S3), minval=1,
                            maxval=100, dtype=jnp.int32)
    out3 = jax.block_until_ready(add_pads(x3, max_seq_len=L3, max_batch_tile=8))
    ref3 = jnp.pad(x3, ((0, 0), (0, L3 - S3)), constant_values=0)
    assert bool(jnp.all(out3 == ref3))

    # Case 4: ragged batch tail (B % tb != 0) -> partial last output block.
    B4, S4, L4 = 20, 128, 256
    x4 = jax.random.randint(jax.random.PRNGKey(2), (B4, S4), minval=1,
                            maxval=100, dtype=jnp.int32)
    out4 = jax.block_until_ready(add_pads(x4, max_seq_len=L4, max_batch_tile=8))
    ref4 = jnp.pad(x4, ((0, 0), (0, L4 - S4)), constant_values=0)
    assert bool(jnp.all(out4 == ref4))

    # Case 5: bf16 input exercises the packed sublane quantum (16) path.
    B5, S5, L5 = 4, 8, 512
    x5 = jax.random.normal(jax.random.PRNGKey(3), (B5, S5), dtype=jnp.bfloat16)
    out5 = jax.block_until_ready(add_pads(x5, max_seq_len=L5))
    ref5 = jnp.pad(x5, ((0, 0), (0, L5 - S5)), constant_values=0)
    assert out5.dtype == jnp.bfloat16
    assert bool(jnp.all(out5 == ref5))

    print("KERNEL_OK")
</pallas_src>

<mosaic_0001>
module attributes {stable_mosaic.version = 11 : i64} {
  func.func @_addpads_kernel(%arg0: i32, %arg1: memref<2x8xi32, #tpu.memory_space<vmem>>, %arg2: memref<2x512xi32, #tpu.memory_space<vmem>>) attributes {dimension_semantics = [#tpu.dimension_semantics<parallel>], iteration_bounds = array<i64: 1>, scalar_prefetch = 0 : i64, scratch_operands = 0 : i64, tpu.core_type = #tpu.core_type<tc>, window_params = [{transform_indices = @transform_0, window_bounds = array<i64: 2, 8>}, {transform_indices = @transform_1, window_bounds = array<i64: 2, 512>}]} {
    %c0 = arith.constant 0 : index
    %c0_0 = arith.constant 0 : index
    %0 = vector.load %arg1[%c0, %c0_0] : memref<2x8xi32, #tpu.memory_space<vmem>>, vector<2x8xi32>
    %c0_1 = arith.constant 0 : index
    %c0_2 = arith.constant 0 : index
    %1 = vector.load %arg2[%c0_1, %c0_2] : memref<2x512xi32, #tpu.memory_space<vmem>>, vector<2x8xi32>
    tpu.vector_store %arg2[%c0_1, %c0_2], %0 {strides = array<i32>} : memref<2x512xi32, #tpu.memory_space<vmem>>, vector<2x8xi32>,
    %c0_i32 = arith.constant 0 : i32
    %2 = vector.broadcast %c0_i32 : i32 to vector<2x120xi32>
    %c0_3 = arith.constant 0 : index
    %c8 = arith.constant 8 : index
    %3 = vector.load %arg2[%c0_3, %c8] : memref<2x512xi32, #tpu.memory_space<vmem>>, vector<2x120xi32>
    tpu.vector_store %arg2[%c0_3, %c8], %2 {strides = array<i32>} : memref<2x512xi32, #tpu.memory_space<vmem>>, vector<2x120xi32>,
    %c0_i32_4 = arith.constant 0 : i32
    %4 = vector.broadcast %c0_i32_4 : i32 to vector<2x384xi32>
    %c0_5 = arith.constant 0 : index
    %c128 = arith.constant 128 : index
    %5 = vector.load %arg2[%c0_5, %c128] : memref<2x512xi32, #tpu.memory_space<vmem>>, vector<2x384xi32>
    tpu.vector_store %arg2[%c0_5, %c128], %4 {strides = array<i32>} : memref<2x512xi32, #tpu.memory_space<vmem>>, vector<2x384xi32>,
    return
  }
  func.func @transform_0(%arg0: i32) -> (i32, i32) {
    %c0_i32 = arith.constant 0 : i32
    %c0_i32_0 = arith.constant 0 : i32
    return %arg0, %c0_i32 : i32, i32
  }
  func.func @transform_1(%arg0: i32) -> (i32, i32) {
    %c0_i32 = arith.constant 0 : i32
    %c0_i32_0 = arith.constant 0 : i32
    return %arg0, %c0_i32 : i32, i32
  }
}

</mosaic_0001>

<llo_original>
// kernel: tpu_custom_call.1
$region0: #{tpu_custom_call.1}
  #allocation0 [shape = 'u32[]', space=smem, size = 0x4, offset = 0x4, fixed_abs, tag = 'smem constant byte address 0x4 - core index']
  #allocation1 [shape = 'u32[144,128]{1,0:T(1,128)}', space=vmem, size = 0x12000, scoped, tag = 'internal scratch']
  %s0 = inlined_call_operand.hbm [shape: s32[2,8], index: 0, kind: input, shape index: {}]
  %s1 = inlined_call_operand.hbm [shape: s32[2,512], index: 1, kind: output, shape index: {}]
  %s2 = sld [smem:[#allocation0]]
  $region18: #{tpu_custom_call.1} parent=0
    _
  %s4 = ssub.s32 1, %s2
  %s5 = scalar_select 0, %s4, %s2
  $region1: #{tpu_custom_call.1} parent=0
    #allocation2 [shape = 'u8[1024]{0}', space=vmem, size = 0x400, scoped, tag = 'input window, operand 0, single buffered']
    #allocation3 [shape = 's32[1]{0}', space=sflag, size = 0x4, scoped, tag = 'scoped memory for tpu_custom_call.1']
    #allocation4 [shape = 's32[1]{0}', space=sflag, size = 0x4, scoped, tag = 'scoped memory for tpu_custom_call.1']
    #allocation5 [shape = 'u8[4096]{0}', space=vmem, size = 0x1000, scoped, tag = 'output window, operand 0, single buffered']
    %6 = vsyncpa [#allocation3], 0
    %7 = vsyncpa [#allocation4], 0
    // Predicated region
    $region2: #{tpu_custom_call.1} parent=1 // pred_check
      _
    $region3: #{tpu_custom_call.1} parent=1 // pred_check_branch
      %9 = sbr.rel (0) target = $region5
    $region4: #{tpu_custom_call.1} parent=1 // pred_region
      %s11 = ssub.s32 32, 32
      %12 = vsyncadd [#allocation3], %s11
      %s14 = sshll.u32 [#allocation2], 4
      %s15 = int_to_ptr.vmem [resolvable:$true] %s14
      %17 = dma.hbm_to_vmem [thread:$0]  %s0, 32, %s15, [#allocation3]
    $region5: #{tpu_custom_call.1} parent=1 // pred_fallthru
      _
    // Predicated region
    $region6: #{tpu_custom_call.1} parent=1 // pred_check
      _
    $region7: #{tpu_custom_call.1} parent=1 // pred_check_branch
      %19 = sbr.rel (0) target = $region9
    $region8: #{tpu_custom_call.1} parent=1 // pred_region
      %20 = dma.done [#allocation3], 32
    $region9: #{tpu_custom_call.1} parent=1 // pred_fallthru
      _
    %v21 = vld [vmem:[#allocation2] sm:$0x3]
    %vm22 = vcmask 58368
    %23 = vst.msk [vmem:[#allocation5] sm:$0x3] %vm22, %v21
    %vm24 = vcmask 1041472
    %25 = vst.msk [vmem:[#allocation5] sm:$0x3] %vm24, 0
    %26 = vst [vmem:[#allocation5 + $0x2] sm:$0x3f] 0
    // Predicated region
    $region10: #{tpu_custom_call.1} parent=1 // pred_check
      _
    $region11: #{tpu_custom_call.1} parent=1 // pred_check_branch
      %28 = sbr.rel (0) target = $region13
    $region12: #{tpu_custom_call.1} parent=1 // pred_region
      %s30 = ssub.s32 128, 128
      %31 = vsyncadd [#allocation4], %s30
      %s33 = sshll.u32 [#allocation5], 4
      %s34 = int_to_ptr.vmem [resolvable:$true] %s33
      %36 = dma.vmem_to_hbm [thread:$0]  %s34, 128, %s1, [#allocation4]
    $region13: #{tpu_custom_call.1} parent=1 // pred_fallthru
      _
    // Predicated region
    $region14: #{tpu_custom_call.1} parent=1 // pred_check
      _
    $region15: #{tpu_custom_call.1} parent=1 // pred_check_branch
      %38 = sbr.rel (0) target = $region17
    $region16: #{tpu_custom_call.1} parent=1 // pred_region
      %39 = dma.done [#allocation4], 128
    $region17: #{tpu_custom_call.1} parent=1 // pred_fallthru
      _
    %40 = vsyncpa [#allocation3], 1
    %41 = vsyncpa [#allocation4], 1

</llo_original>
